<compile_context>
chip_gen: v6e
topology: v6e:2x2x1
jax: 0.10.0
libtpu: 0.0.40
codegen_flags: <defaults>
</compile_context>

<pallas_src>
import functools
import math

import jax
import jax.numpy as jnp
from jax.experimental import pallas as pl
from jax.experimental.pallas import tpu as pltpu


def _round_up(x, n):
    return ((x + n - 1) // n) * n


def _vmem_budget_bytes():
    """Usable VMEM budget per TensorCore (generation-aware, conservative)."""
    try:
        kind = jax.devices()[0].device_kind.lower()
    except Exception:
        kind = ""
    if "v7" in kind or "tpu7" in kind:
        return 48 * 1024 * 1024      # v7x: 64 MiB physical -> leave headroom
    return 96 * 1024 * 1024          # v5e / v6e: 128 MiB physical


def _choose_col_tile(in_dim, out_dim, w_itemsize, vmem_budget):
    """Pick output-column tile tn (multiple of 128) and padded out_dim."""
    out_dim_128 = _round_up(out_dim, 128)
    # Keep the double-buffered fused weight tile (in_dim x 2*tn) to ~1/3 budget.
    per_buf_budget = max(vmem_budget // 6, 128 * 1024)
    tn_cap = per_buf_budget // max(in_dim * 2 * w_itemsize, 1)
    tn_cap = max(128, (tn_cap // 128) * 128)

    if out_dim_128 <= min(512, tn_cap):
        return out_dim_128, out_dim_128                 # single column tile

    candidates = [t for t in (512, 384, 256, 128) if t <= tn_cap] or [128]
    best = None
    for t in candidates:
        out_p = _round_up(out_dim_128, t)
        nct = out_p // t
        key = (nct, out_p, -t)       # fewest x re-reads, then least padding
        if best is None or key < best[0]:
            best = (key, t, out_p)
    return best[1], best[2]


def _choose_row_tile(m, in_dim, x_itemsize, nct, vmem_budget):
    """Pick the row tile tm (multiple of 8) and padded row count m_p."""
    m8 = _round_up(max(m, 1), 8)
    if m8 <= 128:
        tm = m8
    else:
        best = None
        for cand in (512, 256, 128):                    # prefer larger on ties
            waste = _round_up(m8, cand) - m8
            if best is None or waste < best[0]:
                best = (waste, cand)
        tm = best[1]
    # Keep the double-buffered x tile within ~1/3 of the VMEM budget.
    while tm > 8 and 2 * tm * in_dim * x_itemsize > vmem_budget // 3:
        tm = max(8, _round_up(tm // 2, 8))
    m_p = _round_up(m8, tm)
    # Give both TensorCores (v7x megacore) work when the grid would be (1, 1).
    if nct == 1 and m_p // tm == 1 and m8 >= 16:
        tm = _round_up((m8 + 1) // 2, 8)
        m_p = 2 * tm
    return tm, m_p


def pack_gated_tanh_params(w_fc, b_fc, w_gate, b_gate, *, matmul_dtype=None):
    """One-time repack of (W_fc | W_gate) into per-column-tile fused form.

    w_*: (in_dim, out_dim) stored pre-transposed for `x @ W`; b_*: (out_dim,).
    Returns (w_fused (nct, in_dim, 2*tn), b_fused (nct, 1, 2*tn) f32, out_dim).
    Call ONCE at parameter-init time, not per forward call.
    """
    in_dim, out_dim = w_fc.shape
    if matmul_dtype is not None:
        w_fc = w_fc.astype(matmul_dtype)
        w_gate = w_gate.astype(matmul_dtype)
    w_itemsize = jnp.dtype(w_fc.dtype).itemsize
    tn, out_dim_p = _choose_col_tile(in_dim, out_dim, w_itemsize,
                                     _vmem_budget_bytes())
    pad = out_dim_p - out_dim
    nct = out_dim_p // tn

    def prep_w(w):
        w = jnp.pad(w, ((0, 0), (0, pad)))
        # column c -> tile c // tn, offset c % tn
        return w.reshape(in_dim, nct, tn).transpose(1, 0, 2)   # (nct, in_dim, tn)

    def prep_b(b):
        b = jnp.pad(b.astype(jnp.float32), ((0, pad),))
        return b.reshape(nct, 1, tn)                           # (nct, 1, tn) f32

    w_fused = jnp.concatenate([prep_w(w_fc), prep_w(w_gate)], axis=-1)
    b_fused = jnp.concatenate([prep_b(b_fc), prep_b(b_gate)], axis=-1)
    return w_fused, b_fused, out_dim


def _gated_tanh_kernel(x_ref, w_ref, b_ref, o_ref):
    # x_ref: (tm, in_dim)     native / matmul dtype
    # w_ref: (in_dim, 2*tn)   [:, :tn] = W_fc tile, [:, tn:] = W_gate tile
    # b_ref: (1, 2*tn)        f32 (pre-cast at pack time)
    # o_ref: (tm, tn)
    tn = o_ref.shape[-1]
    # Single fused MXU matmul, f32 accumulation.
    z = jnp.dot(x_ref[...], w_ref[...], preferred_element_type=jnp.float32)
    z = z + b_ref[...]
    y_tilda = jnp.tanh(z[:, :tn])                      # fc branch
    # sigmoid(t) == 0.5 * tanh(0.5 * t) + 0.5  -> one EUP op instead of exp+rcp
    gate = 0.5 * jnp.tanh(0.5 * z[:, tn:]) + 0.5       # gate branch
    o_ref[...] = (y_tilda * gate).astype(o_ref.dtype)


@functools.partial(jax.jit, static_argnames=("out_dim",))
def gated_tanh_packed(x, w_fused, b_fused, *, out_dim):
    """Forward pass using pre-packed parameters from pack_gated_tanh_params.

    x: (N, *, in_dim) -> (N, *, out_dim)
    """
    nct, in_dim, tn2 = w_fused.shape
    tn = tn2 // 2
    out_dim_p = nct * tn

    lead_shape = x.shape[:-1]
    m = int(math.prod(lead_shape)) if lead_shape else 1
    out_dtype = x.dtype
    x2d = x.reshape(m, in_dim)
    if x2d.dtype != w_fused.dtype:
        x2d = x2d.astype(w_fused.dtype)                # optional bf16 matmul path

    vmem_budget = _vmem_budget_bytes()
    tm, m_p = _choose_row_tile(m, in_dim, x2d.dtype.itemsize, nct, vmem_budget)
    if m_p != m:
        x2d = jnp.pad(x2d, ((0, m_p - m), (0, 0)))

    # Actual VMEM footprint (double-buffered in/out tiles + f32 z intermediate);
    # request that + headroom, never the whole physical VMEM.
    needed = (2 * tm * in_dim * x2d.dtype.itemsize              # x tiles
              + 2 * in_dim * 2 * tn * w_fused.dtype.itemsize    # fused W tiles
              + 2 * 2 * tn * 4                                  # fused bias
              + 2 * tm * tn * jnp.dtype(out_dtype).itemsize     # output tiles
              + tm * 2 * tn * 4)                                # f32 z scratch
    vmem_limit = int(min(vmem_budget, max(needed * 5 // 4 + (2 << 20), 16 << 20)))

    out2d = pl.pallas_call(
        _gated_tanh_kernel,
        out_shape=jax.ShapeDtypeStruct((m_p, out_dim_p), out_dtype),
        grid_spec=pltpu.PrefetchScalarGridSpec(
            num_scalar_prefetch=0,
            # Column tiles OUTER: each fused weight tile is DMA'd once and
            # reused across every row tile; row tiles inner.
            grid=(nct, m_p // tm),
            in_specs=[
                pl.BlockSpec((tm, in_dim), lambda j, i: (i, 0)),          # x rows
                pl.BlockSpec((None, in_dim, 2 * tn), lambda j, i: (j, 0, 0)),  # W
                pl.BlockSpec((None, 1, 2 * tn), lambda j, i: (j, 0, 0)),       # b
            ],
            out_specs=pl.BlockSpec((tm, tn), lambda j, i: (i, j)),
        ),
        compiler_params=pltpu.CompilerParams(
            dimension_semantics=("parallel", "parallel"),
            vmem_limit_bytes=vmem_limit,
        ),
    )(x2d, w_fused, b_fused)

    out2d = out2d[:m, :out_dim]
    return out2d.reshape(*lead_shape, out_dim)


def gated_tanh(x, w_fc, b_fc, w_gate, b_gate):
    """Convenience one-shot API. For repeated calls, pack once with
    pack_gated_tanh_params() and call gated_tanh_packed()."""
    w_fused, b_fused, out_dim = pack_gated_tanh_params(w_fc, b_fc, w_gate, b_gate)
    return gated_tanh_packed(x, w_fused, b_fused, out_dim=out_dim)


def init_gated_tanh_params(key, in_dim, out_dim, dtype=jnp.float32):
    """Deterministic init mimicking nn.Linear default (U(-1/sqrt(in), 1/sqrt(in)))."""
    k1, k2, k3, k4 = jax.random.split(key, 4)
    bound = 1.0 / math.sqrt(in_dim)
    # Stored already transposed: (in_dim, out_dim).
    w_fc = jax.random.uniform(k1, (in_dim, out_dim), dtype, -bound, bound)
    b_fc = jax.random.uniform(k2, (out_dim,), dtype, -bound, bound)
    w_gate = jax.random.uniform(k3, (in_dim, out_dim), dtype, -bound, bound)
    b_gate = jax.random.uniform(k4, (out_dim,), dtype, -bound, bound)
    return w_fc, b_fc, w_gate, b_gate


if __name__ == "__main__":
    key = jax.random.PRNGKey(0)
    kx, kp, kx2, kp2 = jax.random.split(key, 4)

    # --- test 1: small shape, nct == 1; exercises the two-TensorCore split ---
    N, S, in_dim, out_dim = 2, 8, 32, 32
    x = jax.random.normal(kx, (N, S, in_dim), dtype=jnp.float32)
    params = init_gated_tanh_params(kp, in_dim, out_dim)
    w_fused, b_fused, od = pack_gated_tanh_params(*params)     # hoisted: once
    y = jax.block_until_ready(gated_tanh_packed(x, w_fused, b_fused, out_dim=od))
    w_fc, b_fc, w_gate, b_gate = params
    y_ref = jnp.tanh(x @ w_fc + b_fc) * jax.nn.sigmoid(x @ w_gate + b_gate)
    assert y.shape == (N, S, out_dim)
    assert jnp.allclose(y, y_ref, atol=1e-5, rtol=1e-5)

    # --- test 2: awkward out_dim -> tn=384, nct=2 (no tn=128 cliff) ----------
    N2, S2, in_dim2, out_dim2 = 3, 40, 64, 600
    x2 = jax.random.normal(kx2, (N2, S2, in_dim2), dtype=jnp.float32)
    p2 = init_gated_tanh_params(kp2, in_dim2, out_dim2)
    w_fused2, b_fused2, od2 = pack_gated_tanh_params(*p2)
    y2 = jax.block_until_ready(
        gated_tanh_packed(x2, w_fused2, b_fused2, out_dim=od2))
    y2_ref = jnp.tanh(x2 @ p2[0] + p2[1]) * jax.nn.sigmoid(x2 @ p2[2] + p2[3])
    assert y2.shape == (N2, S2, out_dim2)
    assert jnp.allclose(y2, y2_ref, atol=1e-5, rtol=1e-5)

    # --- test 3: convenience (unpacked) API matches ---------------------------
    y3 = jax.block_until_ready(gated_tanh(x, *params))
    assert jnp.allclose(y3, y_ref, atol=1e-5, rtol=1e-5)

    print("KERNEL_OK")
</pallas_src>

<mosaic_0001>
module attributes {stable_mosaic.version = 11 : i64} {
  func.func @_gated_tanh_kernel(%arg0: i32, %arg1: i32, %arg2: memref<8x32xf32, #tpu.memory_space<vmem>>, %arg3: memref<1x32x256xf32, #tpu.memory_space<vmem>>, %arg4: memref<1x1x256xf32, #tpu.memory_space<vmem>>, %arg5: memref<8x128xf32, #tpu.memory_space<vmem>>) attributes {dimension_semantics = [#tpu.dimension_semantics<parallel>, #tpu.dimension_semantics<parallel>], iteration_bounds = array<i64: 1, 2>, scalar_prefetch = 0 : i64, scratch_operands = 0 : i64, tpu.core_type = #tpu.core_type<tc>, window_params = [{transform_indices = @transform_0, window_bounds = array<i64: 8, 32>}, {transform_indices = @transform_1, window_bounds = array<i64: 1, 32, 256>}, {transform_indices = @transform_2, window_bounds = array<i64: 1, 1, 256>}, {transform_indices = @transform_3, window_bounds = array<i64: 8, 128>}]} {
    %c0 = arith.constant 0 : index
    %c0_0 = arith.constant 0 : index
    %0 = vector.load %arg2[%c0, %c0_0] : memref<8x32xf32, #tpu.memory_space<vmem>>, vector<8x32xf32>
    %c0_1 = arith.constant 0 : index
    %c0_2 = arith.constant 0 : index
    %c0_3 = arith.constant 0 : index
    %1 = vector.load %arg3[%c0_1, %c0_2, %c0_3] : memref<1x32x256xf32, #tpu.memory_space<vmem>>, vector<1x32x256xf32>
    %2 = vector.shape_cast %1 : vector<1x32x256xf32> to vector<32x256xf32>
    %cst = arith.constant dense<0.000000e+00> : vector<8x256xf32>
    %3 = tpu.matmul %0, %2, %cst {dimension_numbers = #tpu.dot_dimension_numbers<[1], [0], [0], [1], [0, 0, 1, 1], [], []>} : vector<8x32xf32>, vector<32x256xf32>, vector<8x256xf32> -> vector<8x256xf32>
    %c0_4 = arith.constant 0 : index
    %c0_5 = arith.constant 0 : index
    %c0_6 = arith.constant 0 : index
    %4 = vector.load %arg4[%c0_4, %c0_5, %c0_6] : memref<1x1x256xf32, #tpu.memory_space<vmem>>, vector<1x1x256xf32>
    %5 = vector.shape_cast %4 : vector<1x1x256xf32> to vector<1x256xf32>
    %6 = vector.broadcast %5 : vector<1x256xf32> to vector<8x256xf32>
    %7 = arith.addf %3, %6 : vector<8x256xf32>
    %8 = vector.extract_strided_slice %7 {offsets = [0, 0], sizes = [8, 128], strides = [1, 1]} : vector<8x256xf32> to vector<8x128xf32>
    %9 = math.tanh %8 : vector<8x128xf32>
    %10 = vector.extract_strided_slice %7 {offsets = [0, 128], sizes = [8, 128], strides = [1, 1]} : vector<8x256xf32> to vector<8x128xf32>
    %cst_7 = arith.constant 5.000000e-01 : f32
    %11 = vector.broadcast %cst_7 : f32 to vector<8x128xf32>
    %12 = arith.mulf %11, %10 : vector<8x128xf32>
    %13 = math.tanh %12 : vector<8x128xf32>
    %cst_8 = arith.constant 5.000000e-01 : f32
    %14 = vector.broadcast %cst_8 : f32 to vector<8x128xf32>
    %15 = arith.mulf %14, %13 : vector<8x128xf32>
    %cst_9 = arith.constant 5.000000e-01 : f32
    %16 = vector.broadcast %cst_9 : f32 to vector<8x128xf32>
    %17 = arith.addf %15, %16 : vector<8x128xf32>
    %18 = arith.mulf %9, %17 : vector<8x128xf32>
    %c0_10 = arith.constant 0 : index
    %c0_11 = arith.constant 0 : index
    %19 = vector.load %arg5[%c0_10, %c0_11] : memref<8x128xf32, #tpu.memory_space<vmem>>, vector<8x128xf32>
    tpu.vector_store %arg5[%c0_10, %c0_11], %18 {strides = array<i32>} : memref<8x128xf32, #tpu.memory_space<vmem>>, vector<8x128xf32>,
    return
  }
  func.func @transform_0(%arg0: i32, %arg1: i32) -> (i32, i32) {
    %c0_i32 = arith.constant 0 : i32
    %c0_i32_0 = arith.constant 0 : i32
    return %arg1, %c0_i32 : i32, i32
  }
  func.func @transform_1(%arg0: i32, %arg1: i32) -> (i32, i32, i32) {
    %c0_i32 = arith.constant 0 : i32
    %c0_i32_0 = arith.constant 0 : i32
    %c0_i32_1 = arith.constant 0 : i32
    return %arg0, %c0_i32, %c0_i32_0 : i32, i32, i32
  }
  func.func @transform_2(%arg0: i32, %arg1: i32) -> (i32, i32, i32) {
    %c0_i32 = arith.constant 0 : i32
    %c0_i32_0 = arith.constant 0 : i32
    %c0_i32_1 = arith.constant 0 : i32
    return %arg0, %c0_i32, %c0_i32_0 : i32, i32, i32
  }
  func.func @transform_3(%arg0: i32, %arg1: i32) -> (i32, i32) {
    %c0_i32 = arith.constant 0 : i32
    return %arg1, %arg0 : i32, i32
  }
}

</mosaic_0001>

<llo_original>
// kernel: gated_tanh_packed.1
$region0: #{gated_tanh_packed.1}
  #allocation0 [shape = 'u32[]', space=smem, size = 0x4, offset = 0x4, fixed_abs, tag = 'smem constant byte address 0x4 - core index']
  #allocation1 [shape = 'u32[144,128]{1,0:T(1,128)}', space=vmem, size = 0x12000, scoped, tag = 'internal scratch']
  %s0 = inlined_call_operand.hbm [shape: f32[16,32], index: 0, kind: input, shape index: {}]
  %s1 = inlined_call_operand.hbm [shape: f32[1,32,256], index: 1, kind: input, shape index: {}]
  %s2 = inlined_call_operand.vmem [shape: f32[1,1,256], index: 2, kind: input, shape index: {}]
  %s3 = inlined_call_operand.vmem [shape: f32[16,128], index: 3, kind: output, shape index: {}]
  %s4 = sld [smem:[#allocation0]]
  $region53: #{gated_tanh_packed.1} parent=0
    _
  %s6 = ssub.s32 1, %s4
  %s7 = scalar_select 0, %s6, %s4
  $region1: #{gated_tanh_packed.1} parent=0
    #allocation2 [shape = 'u8[8192]{0}', space=vmem, size = 0x2000, scoped, tag = 'input window, operand 0']
    #allocation3 [shape = 's32[2]{0}', space=sflag, size = 0x8, scoped, tag = 'scoped memory for gated_tanh_packed.1']
    #allocation4 [shape = 'u8[32768]{0}', space=vmem, size = 0x8000, scoped, tag = 'input window, operand 1, single buffered']
    #allocation5 [shape = 's32[1]{0}', space=sflag, size = 0x4, scoped, tag = 'scoped memory for gated_tanh_packed.1']
    %8 = vsyncpa [#allocation3], 0
    %s9 = scalar_lea.sflag [#allocation3], 1
    %10 = vsyncpa %s9, 0
    %11 = vsyncpa [#allocation5], 0
    loop: start=0, step=1, limit=4
    $region2: #{gated_tanh_packed.1} parent=1 // loop_pre_header
      _
    $region3: #{gated_tanh_packed.1} parent=1 // loop_header
      %s13 = sphi 0, %s17
      %p14 = scmp.ge.s32.totalorder %s13, 4
      %s20 = sphi 0, %s32
      %s21 = sphi 0, %s28
      %s22 = sphi 0, %s20
      %s23 = sphi 0, %s21
      %s24 = sphi 0, %s22
      %s25 = sphi 0, %s23
      %s35 = sphi 0, %s37
      %s38 = sphi 0, %s35
      %s39 = sphi 0, %s38
      %s55 = sphi 0, %s39
      %s61 = sphi 0, %s63
      %s64 = sphi 0, %s61
      %s65 = sphi 0, %s64
      %s81 = sphi 0, %s65
      %s87 = sphi 0, %s89
      %s90 = sphi 0, %s87
      %s91 = sphi 0, %s90
      %s107 = sphi 0, %s91
      %s115 = sphi 0, %s117
      %s118 = sphi 0, %s115
      %s119 = sphi 0, %s118
      %s135 = sphi 0, %s119
    $region4: #{gated_tanh_packed.1} parent=1 // loop_header_branch
      %16 = sbr.rel (%p14) target = $region8
    $region5: #{gated_tanh_packed.1} parent=1 // loop_body
      %s18 = ssub.s32 %s13, 1
      %s19 = ssub.s32 %s13, 2
      %s26 = sadd.s32 1, %s21
      %p27 = scmp.ge.s32.totalorder %s26, 2
      %s28 = scalar_select %p27, 0, %s26
      %s29 = sadd.s32 1, %s20
      %s30 = scalar_select %p27, %s29, %s20
      %p31 = scmp.ge.s32.totalorder %s30, 1
      %s32 = scalar_select %p31, 0, %s30
      %s33 = ssub.s32 %s21, %s28
      %p34 = scmp.eq.s32.totalorder %s33, 0
      %s36 = sadd.s32 %s35, 1
      %s37 = scalar_select %p34, %s35, %s36
      %p40 = pneg %p34
      %p41 = scmp.eq.s32.totalorder %s13, 1
      %p42 = por %p40, %p41
      %p43 = scmp.ne.s32.totalorder %s35, %s38
      %p44 = scmp.eq.s32.totalorder %s13, 0
      %p45 = por %p43, %p44
      %p46 = scmp.ne.s32.totalorder %s35, %s38
      %p47 = scmp.eq.s32.totalorder %s18, 1
      %p48 = por %p46, %p47
      %p49 = scmp.ne.s32.totalorder %s38, %s39
      %p50 = scmp.eq.s32.totalorder %s18, 0
      %p51 = por %p49, %p50
      %p52 = scmp.ne.s32.totalorder %s38, %s39
      %p53 = scmp.eq.s32.totalorder %s19, 1
      %p54 = por %p52, %p53
      %p56 = scmp.ne.s32.totalorder %s39, %s55
      %p57 = scmp.eq.s32.totalorder %s19, 0
      %p58 = por %p56, %p57
      %s59 = ssub.s32 %s20, %s32
      %p60 = scmp.eq.s32.totalorder %s59, 0
      %s62 = sadd.s32 %s61, 1
      %s63 = scalar_select %p60, %s61, %s62
      %p66 = pneg %p60
      %p67 = scmp.eq.s32.totalorder %s13, 1
      %p68 = por %p66, %p67
      %p69 = scmp.ne.s32.totalorder %s61, %s64
      %p70 = scmp.eq.s32.totalorder %s13, 0
      %p71 = por %p69, %p70
      %p72 = scmp.ne.s32.totalorder %s61, %s64
      %p73 = scmp.eq.s32.totalorder %s18, 1
      %p74 = por %p72, %p73
      %p75 = scmp.ne.s32.totalorder %s64, %s65
      %p76 = scmp.eq.s32.totalorder %s18, 0
      %p77 = por %p75, %p76
      %p78 = scmp.ne.s32.totalorder %s64, %s65
      %p79 = scmp.eq.s32.totalorder %s19, 1
      %p80 = por %p78, %p79
      %p82 = scmp.ne.s32.totalorder %s65, %s81
      %p83 = scmp.eq.s32.totalorder %s19, 0
      %p84 = por %p82, %p83
      %s85 = ssub.s32 %s20, %s32
      %p86 = scmp.eq.s32.totalorder %s85, 0
      %s88 = sadd.s32 %s87, 1
      %s89 = scalar_select %p86, %s87, %s88
      %p92 = pneg %p86
      %p93 = scmp.eq.s32.totalorder %s13, 1
      %p94 = por %p92, %p93
      %p95 = scmp.ne.s32.totalorder %s87, %s90
      %p96 = scmp.eq.s32.totalorder %s13, 0
      %p97 = por %p95, %p96
      %p98 = scmp.ne.s32.totalorder %s87, %s90
      %p99 = scmp.eq.s32.totalorder %s18, 1
      %p100 = por %p98, %p99
      %p101 = scmp.ne.s32.totalorder %s90, %s91
      %p102 = scmp.eq.s32.totalorder %s18, 0
      %p103 = por %p101, %p102
      %p104 = scmp.ne.s32.totalorder %s90, %s91
      %p105 = scmp.eq.s32.totalorder %s19, 1
      %p106 = por %p104, %p105
      %p108 = scmp.ne.s32.totalorder %s91, %s107
      %p109 = scmp.eq.s32.totalorder %s19, 0
      %p110 = por %p108, %p109
      %s111 = ssub.s32 %s21, %s28
      %s112 = ssub.s32 %s20, %s32
      %s113 = sor.u32 %s111, %s112
      %p114 = scmp.eq.s32.totalorder %s113, 0
      %s116 = sadd.s32 %s115, 1
      %s117 = scalar_select %p114, %s115, %s116
      %p120 = pneg %p114
      %p121 = scmp.eq.s32.totalorder %s13, 1
      %p122 = por %p120, %p121
      %p123 = scmp.ne.s32.totalorder %s115, %s118
      %p124 = scmp.eq.s32.totalorder %s13, 0
      %p125 = por %p123, %p124
      %p126 = scmp.ne.s32.totalorder %s115, %s118
      %p127 = scmp.eq.s32.totalorder %s18, 1
      %p128 = por %p126, %p127
      %p129 = scmp.ne.s32.totalorder %s118, %s119
      %p130 = scmp.eq.s32.totalorder %s18, 0
      %p131 = por %p129, %p130
      %p132 = scmp.ne.s32.totalorder %s118, %s119
      %p133 = scmp.eq.s32.totalorder %s19, 1
      %p134 = por %p132, %p133
      %p136 = scmp.ne.s32.totalorder %s119, %s135
      %p137 = scmp.eq.s32.totalorder %s19, 0
      %p138 = por %p136, %p137
      %p139 = scmp.le.s32.totalorder 1, %s13
      %p140 = scmp.lt.s32.totalorder %s13, 3
      %p141 = pnand %p139, %p140
      %p142 = pneg %p141
      // Predicated region
      $region9: #{gated_tanh_packed.1} parent=5 // pred_check
        _
      $region10: #{gated_tanh_packed.1} parent=5 // pred_check_branch
        %144 = sbr.rel (%p141) target = $region12
      $region11: #{gated_tanh_packed.1} parent=5 // pred_region
        %s145 = ssub.s32 %s13, 1
        // Predicated region
        $region13: #{gated_tanh_packed.1} parent=11 // pred_check
          %p146 = pneg %p77
        $region14: #{gated_tanh_packed.1} parent=11 // pred_check_branch
          %148 = sbr.rel (%p146) target = $region16
        $region15: #{gated_tanh_packed.1} parent=11 // pred_region
          %s150 = ssub.s32 1024, 1024
          %151 = vsyncadd [#allocation5], %s150
          %s152 = smul.addr %s22, 8
          %s153 = smul.addr %s152, 128
          %s154 = scalar_lea.hbm %s1, %s153
          %s155 = sshll.u32 [#allocation4], 4
          %s156 = int_to_ptr.vmem [resolvable:$true] %s155
          %161 = dma.hbm_to_vmem [thread:$0]  %s154, 1024, %s156, [#allocation5], 256, 256, 16
        $region16: #{gated_tanh_packed.1} parent=11 // pred_fallthru
          _
        // Predicated region
        $region17: #{gated_tanh_packed.1} parent=11 // pred_check
          %p162 = pneg %p103
        $region18: #{gated_tanh_packed.1} parent=11 // pred_check_branch
          %164 = sbr.rel (%p162) target = $region20
        $region19: #{gated_tanh_packed.1} parent=11 // pred_region
          %p165 = scmp.lt.s32.totalorder %s22, 0
          %s166 = scalar_select %p165, %s22, 0
          %s167 = smul.addr %s166, 2
          %s168 = scalar_lea.vmem %s2, %s167
        $region20: #{gated_tanh_packed.1} parent=11 // pred_fallthru
          _
      $region12: #{gated_tanh_packed.1} parent=5 // pred_fallthru
        _
      %p169 = scmp.lt.s32.totalorder %s13, 2
      // Predicated region
      $region21: #{gated_tanh_packed.1} parent=5 // pred_check
        %p170 = pneg %p169
      $region22: #{gated_tanh_packed.1} parent=5 // pred_check_branch
        %172 = sbr.rel (%p170) target = $region24
      $region23: #{gated_tanh_packed.1} parent=5 // pred_region
        // Predicated region
        $region25: #{gated_tanh_packed.1} parent=23 // pred_check
          %p173 = pneg %p45
        $region26: #{gated_tanh_packed.1} parent=23 // pred_check_branch
          %175 = sbr.rel (%p173) target = $region28
        $region27: #{gated_tanh_packed.1} parent=23 // pred_region
          %s176 = sand.u32 %s35, 1
          %s177 = scalar_lea.sflag [#allocation3], %s176
          %s178 = sand.u32 %s35, 1
          %s179 = smul.addr %s178, 8
          %s180 = scalar_lea.vmem [#allocation2], %s179
          %s182 = ssub.s32 128, 128
          %183 = vsyncadd %s177, %s182
          %s184 = smul.addr %s21, 128
          %s185 = scalar_lea.hbm %s0, %s184
          %s187 = sshll.u32 %s180, 4
          %s188 = int_to_ptr.vmem [resolvable:$true] %s187
          %190 = dma.hbm_to_vmem [thread:$0]  %s185, 128, %s188, %s177
        $region28: #{gated_tanh_packed.1} parent=23 // pred_fallthru
          _
      $region24: #{gated_tanh_packed.1} parent=5 // pred_fallthru
        _
      %p191 = scmp.le.s32.totalorder 1, %s13
      %p192 = scmp.lt.s32.totalorder %s13, 3
      %p193 = pnand %p191, %p192
      %p194 = pneg %p193
      // Predicated region
      $region29: #{gated_tanh_packed.1} parent=5 // pred_check
        _
      $region30: #{gated_tanh_packed.1} parent=5 // pred_check_branch
        %196 = sbr.rel (%p193) target = $region32
      $region31: #{gated_tanh_packed.1} parent=5 // pred_region
        %s197 = ssub.s32 %s13, 1
        %s198 = sand.u32 %s38, 1
        %s199 = scalar_lea.sflag [#allocation3], %s198
        %s200 = sand.u32 %s38, 1
        %s201 = smul.addr %s200, 8
        %s202 = scalar_lea.vmem [#allocation2], %s201
        // Predicated region
        $region33: #{gated_tanh_packed.1} parent=31 // pred_check
          %p203 = pneg %p51
        $region34: #{gated_tanh_packed.1} parent=31 // pred_check_branch
          %205 = sbr.rel (%p203) target = $region36
        $region35: #{gated_tanh_packed.1} parent=31 // pred_region
          %206 = dma.done %s199, 128
        $region36: #{gated_tanh_packed.1} parent=31 // pred_fallthru
          _
        // Predicated region
        $region37: #{gated_tanh_packed.1} parent=31 // pred_check
          %p207 = pneg %p77
        $region38: #{gated_tanh_packed.1} parent=31 // pred_check_branch
          %209 = sbr.rel (%p207) target = $region40
        $region39: #{gated_tanh_packed.1} parent=31 // pred_region
          %210 = dma.done [#allocation5], 1024
        $region40: #{gated_tanh_packed.1} parent=31 // pred_fallthru
          _
        %s211 = sand.u32 %s38, 1
        %s212 = scalar_lea.sflag [#allocation3], %s211
        %s213 = sand.u32 %s38, 1
        %s214 = smul.addr %s213, 8
        %s215 = scalar_lea.vmem [#allocation2], %s214
        %p216 = pneg %p51
        %p217 = pneg %p48
        %p218 = pneg %p77
        %p219 = pneg %p74
        %p220 = scmp.lt.s32.totalorder %s22, 0
        %s221 = scalar_select %p220, %s22, 0
        %s222 = smul.addr %s221, 2
        %s223 = scalar_lea.vmem %s2, %s222
        %p224 = pneg %p103
        %p225 = pneg %p100
        %p226 = pneg %p131
        %p227 = pneg %p128
        %p228 = scmp.lt.s32.totalorder %s23, 1
        %s229 = scalar_select %p228, %s23, 1
        %p230 = scmp.lt.s32.totalorder %s22, 0
        %s231 = scalar_select %p230, %s22, 0
        %s232 = sadd.s32 %s231, %s229
        %s233 = smul.addr %s232, 8
        %s234 = scalar_lea.vmem %s3, %s233
        %p235 = scmp.lt.s32.totalorder %s22, 0
        %s236 = scalar_select %p235, %s22, 0
        %s237 = smul.addr %s236, 2
        %s238 = scalar_lea.vmem %s2, %s237
        %p239 = scmp.lt.s32.totalorder %s23, 1
        %s240 = scalar_select %p239, %s23, 1
        %p241 = scmp.lt.s32.totalorder %s22, 0
        %s242 = scalar_select %p241, %s22, 0
        %s243 = sadd.s32 %s242, %s240
        %s244 = smul.addr %s243, 8
        %s245 = scalar_lea.vmem %s3, %s244
        %v246 = vld [vmem:[%s202] sm:$0xff]
        %v247 = vld [vmem:[#allocation4] sm:$0xff]
        %v248 = vld [vmem:[#allocation4 + $0x8] sm:$0xff]
        %v249 = vld [vmem:[#allocation4 + $0x10] sm:$0xff]
        %v250 = vld [vmem:[#allocation4 + $0x18] sm:$0xff]
        %v251 = vld [vmem:[#allocation4 + $0x20] sm:$0xff]
        %v252 = vld [vmem:[#allocation4 + $0x28] sm:$0xff]
        %v253 = vld [vmem:[#allocation4 + $0x30] sm:$0xff]
        %v254 = vld [vmem:[#allocation4 + $0x38] sm:$0xff]
        %v255 = vld [vmem:[%s238] sm:$0x3]
        %v257 = vlaneseq
        %v258 = vshrl.u32 %v257, 7
        %v259 = vsub.s32 0, %v258
        %v260 = vrot.slane %v255, %v259
        %v261 = vlaneseq
        %v262 = vshrl.u32 %v261, 7
        %v263 = vsub.s32 1, %v262
        %v264 = vrot.slane %v255, %v263
        %vm267 = vcmask 261120
        %v269 = vsel %vm267, %v246, 0
        %271 = vmatprep.subr.mxu0 0.0
        %272 = vmatpush1.msra.mxu0 0.0
        %273 = vmatprep.subr.mxu0 0.0
        %274 = vmatpush1.msra.mxu0 0.0
        %275 = vmatprep.subr.mxu0 0.0
        %276 = vmatpush1.msra.mxu0 0.0
        %277 = vmatprep.subr.mxu0 0.0
        %278 = vmatpush1.msra.mxu0 0.0
        %279 = vmatprep.subr.mxu0 0.0
        %280 = vmatpush1.msra.mxu0 0.0
        %281 = vmatprep.subr.mxu0 0.0
        %282 = vmatpush1.msra.mxu0 0.0
        %283 = vmatprep.subr.mxu0 0.0
        %284 = vmatpush1.msra.mxu0 0.0
        %285 = vmatprep.subr.mxu0 0.0
        %286 = vmatpush1.msra.mxu0 0.0
        %287 = vmatprep.subr.mxu0 0.0
        %288 = vmatpush1.msra.mxu0 0.0
        %289 = vmatprep.subr.mxu0 0.0
        %290 = vmatpush1.msra.mxu0 0.0
        %291 = vmatprep.subr.mxu0 0.0
        %292 = vmatpush1.msra.mxu0 0.0
        %293 = vmatprep.subr.mxu0 0.0
        %294 = vmatpush1.msra.mxu0 0.0
        %295 = vmatprep.subr.mxu0 %v254
        %296 = vmatpush1.msra.mxu0 %v253
        %297 = vmatprep.subr.mxu0 %v252
        %298 = vmatpush1.msra.mxu0 %v251
        %299 = vmatprep.subr.mxu0 %v250
        %300 = vmatpush1.msra.mxu0 %v249
        %301 = vmatprep.subr.mxu0 %v248
        %302 = vmatpush1.msra.mxu0 %v247
        %303 = vmatprep.subr.mxu0 0.0
        %304 = vmatpush2.msra.mxu0 0.0
        %305 = vmatprep.subr.mxu0 0.0
        %306 = vmatpush2.msra.mxu0 0.0
        %307 = vmatprep.subr.mxu0 0.0
        %308 = vmatpush2.msra.mxu0 0.0
        %309 = vmatprep.subr.mxu0 0.0
        %310 = vmatpush2.msra.mxu0 0.0
        %311 = vmatprep.subr.mxu0 0.0
        %312 = vmatpush2.msra.mxu0 0.0
        %313 = vmatprep.subr.mxu0 0.0
        %314 = vmatpush2.msra.mxu0 0.0
        %315 = vmatprep.subr.mxu0 0.0
        %316 = vmatpush2.msra.mxu0 0.0
        %317 = vmatprep.subr.mxu0 0.0
        %318 = vmatpush2.msra.mxu0 0.0
        %319 = vmatprep.subr.mxu0 0.0
        %320 = vmatpush2.msra.mxu0 0.0
        %321 = vmatprep.subr.mxu0 0.0
        %322 = vmatpush2.msra.mxu0 0.0
        %323 = vmatprep.subr.mxu0 0.0
        %324 = vmatpush2.msra.mxu0 0.0
        %325 = vmatprep.subr.mxu0 0.0
        %326 = vmatpush2.msra.mxu0 0.0
        %327 = vmatprep.subr.mxu0 0.0
        %328 = vmatpush2.msra.mxu0 0.0
        %329 = vmatprep.subr.mxu0 0.0
        %330 = vmatpush2.msra.mxu0 0.0
        %331 = vmatprep.subr.mxu0 0.0
        %332 = vmatpush2.msra.mxu0 0.0
        %333 = vmatprep.subr.mxu0 0.0
        %334 = vmatpush2.msra.mxu0 0.0
        %335 = vmatprep.mubr.f32.mxu0 0.0
        %336 = vmatmul.mubr.f32.gmra.mxu0 %v269
        %v337 = vpop.f32.mrf.mxu0
        %v338 = vadd.f32 %v260, %v337
        %v339 = vpop.f32.mrf.mxu0
        %v340 = vadd.f32 %v264, %v339
        %341 = vdwg.mxu0
        %v342 = vtanh.pop %v338
        %v343 = vmul.f32 %v340, 0.5
        %v344 = vtanh.pop %v343
        %v345 = vmul.f32 %v344, 0.5
        %v346 = vadd.f32 %v345, 0.5
        %v347 = vmul.f32 %v342, %v346
        %348 = vst [vmem:[%s245] sm:$0xff] %v347
        %p349 = scmp.lt.s32.totalorder %s23, 1
        %s350 = scalar_select %p349, %s23, 1
        %p351 = scmp.lt.s32.totalorder %s22, 0
        %s352 = scalar_select %p351, %s22, 0
        %s353 = sadd.s32 %s352, %s350
        %s354 = smul.addr %s353, 8
        %s355 = scalar_lea.vmem %s3, %s354
        // Predicated region
        $region41: #{gated_tanh_packed.1} parent=31 // pred_check
          %p356 = pneg %p128
        $region42: #{gated_tanh_packed.1} parent=31 // pred_check_branch
          %358 = sbr.rel (%p356) target = $region44
        $region43: #{gated_tanh_packed.1} parent=31 // pred_region
          _
        $region44: #{gated_tanh_packed.1} parent=31 // pred_fallthru
          _
      $region32: #{gated_tanh_packed.1} parent=5 // pred_fallthru
        _
      %p359 = scmp.le.s32.totalorder 2, %s13
      // Predicated region
      $region45: #{gated_tanh_packed.1} parent=5 // pred_check
        %p360 = pneg %p359
      $region46: #{gated_tanh_packed.1} parent=5 // pred_check_branch
        %362 = sbr.rel (%p360) target = $region48
      $region47: #{gated_tanh_packed.1} parent=5 // pred_region
        %s363 = ssub.s32 %s13, 2
        // Predicated region
        $region49: #{gated_tanh_packed.1} parent=47 // pred_check
          %p364 = pneg %p134
        $region50: #{gated_tanh_packed.1} parent=47 // pred_check_branch
          %366 = sbr.rel (%p364) target = $region52
        $region51: #{gated_tanh_packed.1} parent=47 // pred_region
          %p367 = scmp.lt.s32.totalorder %s25, 1
          %s368 = scalar_select %p367, %s25, 1
          %p369 = scmp.lt.s32.totalorder %s24, 0
          %s370 = scalar_select %p369, %s24, 0
          %s371 = sadd.s32 %s370, %s368
          %s372 = smul.addr %s371, 8
          %s373 = scalar_lea.vmem %s3, %s372
        $region52: #{gated_tanh_packed.1} parent=47 // pred_fallthru
          _
      $region48: #{gated_tanh_packed.1} parent=5 // pred_fallthru
        _
    $region6: #{gated_tanh_packed.1} parent=1 // loop_footer
      %s17 = sadd.s32 1, %s13
    $region7: #{gated_tanh_packed.1} parent=1 // loop_footer_branch
      %12 = sbr.rel target = $region3
    $region8: #{gated_tanh_packed.1} parent=1 // loop_exit
      _
    %374 = vsyncpa [#allocation3], 1
    %s375 = scalar_lea.sflag [#allocation3], 1
    %376 = vsyncpa %s375, 1
    %377 = vsyncpa [#allocation5], 1

</llo_original>
